<compile_context>
chip_gen: v5e
topology: v5e:2x2
jax: 0.10.0
libtpu: 0.0.40
codegen_flags: <defaults>
</compile_context>

<pallas_src>
import math

import jax
import jax.numpy as jnp
from jax.experimental import pallas as pl
from jax.experimental.pallas import tpu as pltpu

_LANES = 128


def _gelu(x):
    # BERT tanh-approx GELU, matching the PyTorch GELU module exactly.
    c = math.sqrt(2.0 / math.pi)
    return 0.5 * x * (1.0 + jnp.tanh(c * (x + 0.044715 * x * x * x)))


def review_generator_kernel(am_ref, mask_ref, tq_ref,
                            w1a_ref, w1b_ref, b1_ref,
                            w2_ref, b2_ref,
                            w3_ref, b3_ref,
                            out_ref):
    # (TB, S, D) activation block; cast to f32 after the (possibly bf16) DMA.
    am = am_ref[...].astype(jnp.float32)
    m = mask_ref[...].astype(jnp.float32)            # (TB, S), 0/1 mask

    # masked mean-pool over the sequence axis (multiply, not compare+select)
    pooled = jnp.sum(am * m[:, :, None], axis=1)     # (TB, D)
    count = jnp.maximum(jnp.sum(m, axis=1, keepdims=True), 1e-4)   # clamp(min=1e-4)
    pooled = pooled / count

    tq = tq_ref[...].astype(jnp.float32)             # (TB, D)

    # fc1 on cat([pooled, tq], -1), expressed as two block matmuls (no in-kernel concat)
    h1 = _gelu(jnp.dot(pooled, w1a_ref[...], preferred_element_type=jnp.float32)
               + jnp.dot(tq, w1b_ref[...], preferred_element_type=jnp.float32)
               + b1_ref[...])

    h2 = _gelu(jnp.dot(h1, w2_ref[...], preferred_element_type=jnp.float32)
               + b2_ref[...])

    # fc3 (single output column): VPU multiply + lane reduction, skip the MXU.
    logits = jnp.sum(h2 * w3_ref[...], axis=-1, keepdims=True) + b3_ref[...]   # (TB, 1)
    probs = jax.nn.sigmoid(logits)

    # lane-dense merged output: lane 0 = logit, lane 1 = prob, remaining lanes zero.
    tb = out_ref.shape[0]
    lane = jax.lax.broadcasted_iota(jnp.int32, (tb, _LANES), 1)
    out_ref[...] = jnp.where(lane == 0, logits,
                             jnp.where(lane == 1, probs, 0.0))


def init_review_generator_params(key, d_model):
    """ReviewGenerator(d_model) == ScoreGenerator(2*d_model):
       fc1: 2D -> D, fc2: D -> D//2, fc3: D//2 -> 1 (PyTorch Linear default init)."""
    d_in = 2 * d_model
    h1, h2 = d_in // 2, d_in // 4

    def linear(k, fan_in, fan_out):
        bound = 1.0 / math.sqrt(fan_in)
        kw, kb = jax.random.split(k)
        w = jax.random.uniform(kw, (fan_in, fan_out), jnp.float32, -bound, bound)
        b = jax.random.uniform(kb, (1, fan_out), jnp.float32, -bound, bound)
        return w, b

    k1, k2, k3 = jax.random.split(key, 3)
    w1, b1 = linear(k1, d_in, h1)
    w2, b2 = linear(k2, h1, h2)
    w3, b3 = linear(k3, h2, 1)
    # split fc1 weight: rows [0:D) act on pooled features, rows [D:2D) on target_question
    w1a, w1b = w1[:d_model], w1[d_model:]
    return (w1a, w1b, b1, w2, b2, w3, b3)


def _pick_batch_tile(B, S, D, itemsize, budget_bytes=8 * 1024 * 1024):
    """Largest multiple-of-8 batch tile whose (S, D) slab fits a per-buffer budget
    (the pipeline double-buffers it, and a 32 MiB VMEM limit leaves v7x headroom)."""
    rows = budget_bytes // max(1, S * D * itemsize)
    rows = max(8, (rows // 8) * 8)
    rows = min(rows, 1024)
    return B if B <= rows else rows


def review_generator_forward(am_outputs, masks, target_question, params, *, batch_tile=None):
    B, S, D = am_outputs.shape
    mask2d = masks.reshape(B, S)                     # masks.squeeze(1)   (dtype untouched)
    tq = target_question.reshape(B, D)               # target_question.squeeze(1)
    w1a, w1b, b1, w2, b2, w3, b3 = params
    w3_row = w3.reshape(1, -1)                       # (1, H2) row for the VPU reduce

    tb = batch_tile if batch_tile is not None else _pick_batch_tile(
        B, S, D, am_outputs.dtype.itemsize)
    tb = min(tb, B)
    grid = (pl.cdiv(B, tb),)

    const2 = lambda i: (0, 0)
    out = pl.pallas_call(
        review_generator_kernel,
        out_shape=jax.ShapeDtypeStruct((B, _LANES), jnp.float32),
        grid=grid,
        in_specs=[
            pl.BlockSpec((tb, S, D), lambda i: (i, 0, 0)),   # am_outputs (native dtype)
            pl.BlockSpec((tb, S), lambda i: (i, 0)),          # mask (int, cast in kernel)
            pl.BlockSpec((tb, D), lambda i: (i, 0)),          # target question
            pl.BlockSpec(w1a.shape, const2),                  # weights: constant blocks
            pl.BlockSpec(w1b.shape, const2),
            pl.BlockSpec(b1.shape, const2),
            pl.BlockSpec(w2.shape, const2),
            pl.BlockSpec(b2.shape, const2),
            pl.BlockSpec(w3_row.shape, const2),
            pl.BlockSpec(b3.shape, const2),
        ],
        out_specs=pl.BlockSpec((tb, _LANES), lambda i: (i, 0)),
        compiler_params=pltpu.CompilerParams(
            dimension_semantics=("parallel",),      # shard batch across v7x's 2 TCs
            vmem_limit_bytes=32 * 1024 * 1024,
        ),
    )(am_outputs, mask2d, tq, w1a, w1b, b1, w2, b2, w3_row, b3)

    # lane 0 = logit, lane 1 = sigmoid(logit)  (== .squeeze(-1) outputs of the module)
    return out[:, 0], out[:, 1]


def _reference_forward(am_outputs, masks, target_question, params):
    """Pure-JAX reference reproducing the PyTorch forward (for validation)."""
    w1a, w1b, b1, w2, b2, w3, b3 = params
    B, S, D = am_outputs.shape
    m = masks.reshape(B, S).astype(jnp.float32)
    masked = jnp.where(m[:, :, None] == 1.0, am_outputs.astype(jnp.float32), 0.0)
    pooled = masked.sum(1)
    count = jnp.clip(m.sum(1, keepdims=True), 1e-4, None)
    pooled = pooled / count
    x = jnp.concatenate([pooled, target_question.reshape(B, D).astype(jnp.float32)], axis=-1)
    w1 = jnp.concatenate([w1a, w1b], axis=0)
    h1 = _gelu(x @ w1 + b1)
    h2 = _gelu(h1 @ w2 + b2)
    logits = h2 @ w3 + b3
    return logits[:, 0], jax.nn.sigmoid(logits)[:, 0]


if __name__ == "__main__":
    B, S, d_model = 8, 8, 32

    key = jax.random.PRNGKey(0)
    k_am, k_mask, k_tq, k_params = jax.random.split(key, 4)

    am_outputs = jax.random.normal(k_am, (B, S, d_model), jnp.float32)
    masks = (jax.random.uniform(k_mask, (B, 1, S)) > 0.3).astype(jnp.int32)
    target_question = jax.random.normal(k_tq, (B, 1, d_model), jnp.float32)

    params = init_review_generator_params(k_params, d_model)

    logit, prob = review_generator_forward(am_outputs, masks, target_question, params)
    jax.block_until_ready((logit, prob))

    ref_logit, ref_prob = _reference_forward(am_outputs, masks, target_question, params)
    assert logit.shape == (B,) and prob.shape == (B,)
    assert jnp.allclose(logit, ref_logit, atol=1e-5, rtol=1e-5)
    assert jnp.allclose(prob, ref_prob, atol=1e-5, rtol=1e-5)

    print("KERNEL_OK")
</pallas_src>

<mosaic_0001>
module attributes {stable_mosaic.version = 11 : i64} {
  func.func @review_generator_kernel(%arg0: i32, %arg1: memref<8x8x32xf32, #tpu.memory_space<vmem>>, %arg2: memref<8x8xi32, #tpu.memory_space<vmem>>, %arg3: memref<8x32xf32, #tpu.memory_space<vmem>>, %arg4: memref<32x32xf32, #tpu.memory_space<vmem>>, %arg5: memref<32x32xf32, #tpu.memory_space<vmem>>, %arg6: memref<1x32xf32, #tpu.memory_space<vmem>>, %arg7: memref<32x16xf32, #tpu.memory_space<vmem>>, %arg8: memref<1x16xf32, #tpu.memory_space<vmem>>, %arg9: memref<1x16xf32, #tpu.memory_space<vmem>>, %arg10: memref<1x1xf32, #tpu.memory_space<vmem>>, %arg11: memref<8x128xf32, #tpu.memory_space<vmem>>) attributes {dimension_semantics = [#tpu.dimension_semantics<parallel>], iteration_bounds = array<i64: 1>, scalar_prefetch = 0 : i64, scratch_operands = 0 : i64, tpu.core_type = #tpu.core_type<tc>, window_params = [{transform_indices = @transform_0, window_bounds = array<i64: 8, 8, 32>}, {transform_indices = @transform_1, window_bounds = array<i64: 8, 8>}, {transform_indices = @transform_2, window_bounds = array<i64: 8, 32>}, {pipeline_mode = #tpu.pipeline_mode<synchronous>, transform_indices = @transform_3, window_bounds = array<i64: 32, 32>}, {pipeline_mode = #tpu.pipeline_mode<synchronous>, transform_indices = @transform_4, window_bounds = array<i64: 32, 32>}, {pipeline_mode = #tpu.pipeline_mode<synchronous>, transform_indices = @transform_5, window_bounds = array<i64: 1, 32>}, {pipeline_mode = #tpu.pipeline_mode<synchronous>, transform_indices = @transform_6, window_bounds = array<i64: 32, 16>}, {pipeline_mode = #tpu.pipeline_mode<synchronous>, transform_indices = @transform_7, window_bounds = array<i64: 1, 16>}, {pipeline_mode = #tpu.pipeline_mode<synchronous>, transform_indices = @transform_8, window_bounds = array<i64: 1, 16>}, {pipeline_mode = #tpu.pipeline_mode<synchronous>, transform_indices = @transform_9, window_bounds = array<i64: 1, 1>}, {transform_indices = @transform_10, window_bounds = array<i64: 8, 128>}]} {
    %c0 = arith.constant 0 : index
    %c0_0 = arith.constant 0 : index
    %c0_1 = arith.constant 0 : index
    %0 = vector.load %arg1[%c0, %c0_0, %c0_1] : memref<8x8x32xf32, #tpu.memory_space<vmem>>, vector<8x8x32xf32>
    %c0_2 = arith.constant 0 : index
    %c0_3 = arith.constant 0 : index
    %1 = vector.load %arg2[%c0_2, %c0_3] : memref<8x8xi32, #tpu.memory_space<vmem>>, vector<8x8xi32>
    %2 = arith.sitofp %1 : vector<8x8xi32> to vector<8x8xf32>
    %3 = vector.shape_cast %2 : vector<8x8xf32> to vector<8x8x1xf32>
    %4 = vector.broadcast %3 : vector<8x8x1xf32> to vector<8x8x32xf32>
    %5 = arith.mulf %0, %4 : vector<8x8x32xf32>
    %cst = arith.constant dense<0.000000e+00> : vector<8x32xf32>
    %6 = vector.multi_reduction <add>, %5, %cst [1] : vector<8x8x32xf32> to vector<8x32xf32>
    %cst_4 = arith.constant dense<0.000000e+00> : vector<8xf32>
    %7 = vector.multi_reduction <add>, %2, %cst_4 [1] : vector<8x8xf32> to vector<8xf32>
    %8 = vector.shape_cast %7 : vector<8xf32> to vector<8x1xf32>
    %cst_5 = arith.constant 9.99999974E-5 : f32
    %9 = vector.broadcast %cst_5 : f32 to vector<8x1xf32>
    %10 = arith.maximumf %8, %9 : vector<8x1xf32>
    %11 = vector.broadcast %10 : vector<8x1xf32> to vector<8x32xf32>
    %12 = arith.divf %6, %11 : vector<8x32xf32>
    %c0_6 = arith.constant 0 : index
    %c0_7 = arith.constant 0 : index
    %13 = vector.load %arg3[%c0_6, %c0_7] : memref<8x32xf32, #tpu.memory_space<vmem>>, vector<8x32xf32>
    %c0_8 = arith.constant 0 : index
    %c0_9 = arith.constant 0 : index
    %14 = vector.load %arg4[%c0_8, %c0_9] : memref<32x32xf32, #tpu.memory_space<vmem>>, vector<32x32xf32>
    %cst_10 = arith.constant dense<0.000000e+00> : vector<8x32xf32>
    %15 = tpu.matmul %12, %14, %cst_10 {dimension_numbers = #tpu.dot_dimension_numbers<[1], [0], [0], [1], [0, 0, 1, 1], [], []>} : vector<8x32xf32>, vector<32x32xf32>, vector<8x32xf32> -> vector<8x32xf32>
    %c0_11 = arith.constant 0 : index
    %c0_12 = arith.constant 0 : index
    %16 = vector.load %arg5[%c0_11, %c0_12] : memref<32x32xf32, #tpu.memory_space<vmem>>, vector<32x32xf32>
    %cst_13 = arith.constant dense<0.000000e+00> : vector<8x32xf32>
    %17 = tpu.matmul %13, %16, %cst_13 {dimension_numbers = #tpu.dot_dimension_numbers<[1], [0], [0], [1], [0, 0, 1, 1], [], []>} : vector<8x32xf32>, vector<32x32xf32>, vector<8x32xf32> -> vector<8x32xf32>
    %18 = arith.addf %15, %17 : vector<8x32xf32>
    %c0_14 = arith.constant 0 : index
    %c0_15 = arith.constant 0 : index
    %19 = vector.load %arg6[%c0_14, %c0_15] : memref<1x32xf32, #tpu.memory_space<vmem>>, vector<1x32xf32>
    %20 = vector.broadcast %19 : vector<1x32xf32> to vector<8x32xf32>
    %21 = arith.addf %18, %20 : vector<8x32xf32>
    %cst_16 = arith.constant 5.000000e-01 : f32
    %22 = vector.broadcast %cst_16 : f32 to vector<8x32xf32>
    %23 = arith.mulf %22, %21 : vector<8x32xf32>
    %cst_17 = arith.constant 4.471500e-02 : f32
    %24 = vector.broadcast %cst_17 : f32 to vector<8x32xf32>
    %25 = arith.mulf %24, %21 : vector<8x32xf32>
    %26 = arith.mulf %25, %21 : vector<8x32xf32>
    %27 = arith.mulf %26, %21 : vector<8x32xf32>
    %28 = arith.addf %21, %27 : vector<8x32xf32>
    %cst_18 = arith.constant 0.797884583 : f32
    %29 = vector.broadcast %cst_18 : f32 to vector<8x32xf32>
    %30 = arith.mulf %29, %28 : vector<8x32xf32>
    %31 = math.tanh %30 : vector<8x32xf32>
    %cst_19 = arith.constant 1.000000e+00 : f32
    %32 = vector.broadcast %cst_19 : f32 to vector<8x32xf32>
    %33 = arith.addf %32, %31 : vector<8x32xf32>
    %34 = arith.mulf %23, %33 : vector<8x32xf32>
    %c0_20 = arith.constant 0 : index
    %c0_21 = arith.constant 0 : index
    %35 = vector.load %arg7[%c0_20, %c0_21] : memref<32x16xf32, #tpu.memory_space<vmem>>, vector<32x16xf32>
    %cst_22 = arith.constant dense<0.000000e+00> : vector<8x16xf32>
    %36 = tpu.matmul %34, %35, %cst_22 {dimension_numbers = #tpu.dot_dimension_numbers<[1], [0], [0], [1], [0, 0, 1, 1], [], []>} : vector<8x32xf32>, vector<32x16xf32>, vector<8x16xf32> -> vector<8x16xf32>
    %c0_23 = arith.constant 0 : index
    %c0_24 = arith.constant 0 : index
    %37 = vector.load %arg8[%c0_23, %c0_24] : memref<1x16xf32, #tpu.memory_space<vmem>>, vector<1x16xf32>
    %38 = vector.broadcast %37 : vector<1x16xf32> to vector<8x16xf32>
    %39 = arith.addf %36, %38 : vector<8x16xf32>
    %cst_25 = arith.constant 5.000000e-01 : f32
    %40 = vector.broadcast %cst_25 : f32 to vector<8x16xf32>
    %41 = arith.mulf %40, %39 : vector<8x16xf32>
    %cst_26 = arith.constant 4.471500e-02 : f32
    %42 = vector.broadcast %cst_26 : f32 to vector<8x16xf32>
    %43 = arith.mulf %42, %39 : vector<8x16xf32>
    %44 = arith.mulf %43, %39 : vector<8x16xf32>
    %45 = arith.mulf %44, %39 : vector<8x16xf32>
    %46 = arith.addf %39, %45 : vector<8x16xf32>
    %cst_27 = arith.constant 0.797884583 : f32
    %47 = vector.broadcast %cst_27 : f32 to vector<8x16xf32>
    %48 = arith.mulf %47, %46 : vector<8x16xf32>
    %49 = math.tanh %48 : vector<8x16xf32>
    %cst_28 = arith.constant 1.000000e+00 : f32
    %50 = vector.broadcast %cst_28 : f32 to vector<8x16xf32>
    %51 = arith.addf %50, %49 : vector<8x16xf32>
    %52 = arith.mulf %41, %51 : vector<8x16xf32>
    %c0_29 = arith.constant 0 : index
    %c0_30 = arith.constant 0 : index
    %53 = vector.load %arg9[%c0_29, %c0_30] : memref<1x16xf32, #tpu.memory_space<vmem>>, vector<1x16xf32>
    %54 = vector.broadcast %53 : vector<1x16xf32> to vector<8x16xf32>
    %55 = arith.mulf %52, %54 : vector<8x16xf32>
    %cst_31 = arith.constant dense<0.000000e+00> : vector<8xf32>
    %56 = vector.multi_reduction <add>, %55, %cst_31 [1] : vector<8x16xf32> to vector<8xf32>
    %57 = vector.shape_cast %56 : vector<8xf32> to vector<8x1xf32>
    %c0_32 = arith.constant 0 : index
    %c0_33 = arith.constant 0 : index
    %58 = vector.load %arg10[%c0_32, %c0_33] : memref<1x1xf32, #tpu.memory_space<vmem>>, vector<1x1xf32>
    %59 = vector.broadcast %58 : vector<1x1xf32> to vector<8x1xf32>
    %60 = arith.addf %57, %59 : vector<8x1xf32>
    %61 = arith.negf %60 : vector<8x1xf32>
    %62 = math.exp %61 : vector<8x1xf32>
    %cst_34 = arith.constant 1.000000e+00 : f32
    %63 = vector.broadcast %cst_34 : f32 to vector<8x1xf32>
    %64 = arith.addf %63, %62 : vector<8x1xf32>
    %65 = arith.divf %63, %64 : vector<8x1xf32>
    %66 = tpu.iota {dimensions = array<i32: 1>} : vector<8x128xi32>
    %c0_i32 = arith.constant 0 : i32
    %67 = vector.broadcast %c0_i32 : i32 to vector<8x128xi32>
    %68 = arith.cmpi eq, %66, %67 : vector<8x128xi32>
    %c1_i32 = arith.constant 1 : i32
    %69 = vector.broadcast %c1_i32 : i32 to vector<8x128xi32>
    %70 = arith.cmpi eq, %66, %69 : vector<8x128xi32>
    %cst_35 = arith.constant 0.000000e+00 : f32
    %71 = vector.shape_cast %65 : vector<8x1xf32> to vector<8x1xf32>
    %72 = vector.broadcast %71 : vector<8x1xf32> to vector<8x128xf32>
    %73 = vector.broadcast %cst_35 : f32 to vector<8x128xf32>
    %74 = arith.select %70, %72, %73 : vector<8x128xi1>, vector<8x128xf32>
    %75 = vector.shape_cast %60 : vector<8x1xf32> to vector<8x1xf32>
    %76 = vector.broadcast %75 : vector<8x1xf32> to vector<8x128xf32>
    %77 = arith.select %68, %76, %74 : vector<8x128xi1>, vector<8x128xf32>
    %c0_36 = arith.constant 0 : index
    %c0_37 = arith.constant 0 : index
    %78 = vector.load %arg11[%c0_36, %c0_37] : memref<8x128xf32, #tpu.memory_space<vmem>>, vector<8x128xf32>
    tpu.vector_store %arg11[%c0_36, %c0_37], %77 {strides = array<i32>} : memref<8x128xf32, #tpu.memory_space<vmem>>, vector<8x128xf32>,
    return
  }
  func.func @transform_0(%arg0: i32) -> (i32, i32, i32) {
    %c0_i32 = arith.constant 0 : i32
    %c0_i32_0 = arith.constant 0 : i32
    %c0_i32_1 = arith.constant 0 : i32
    return %arg0, %c0_i32, %c0_i32_0 : i32, i32, i32
  }
  func.func @transform_1(%arg0: i32) -> (i32, i32) {
    %c0_i32 = arith.constant 0 : i32
    %c0_i32_0 = arith.constant 0 : i32
    return %arg0, %c0_i32 : i32, i32
  }
  func.func @transform_2(%arg0: i32) -> (i32, i32) {
    %c0_i32 = arith.constant 0 : i32
    %c0_i32_0 = arith.constant 0 : i32
    return %arg0, %c0_i32 : i32, i32
  }
  func.func @transform_3(%arg0: i32) -> (i32, i32) {
    %c0_i32 = arith.constant 0 : i32
    %c0_i32_0 = arith.constant 0 : i32
    %c0_i32_1 = arith.constant 0 : i32
    return %c0_i32, %c0_i32_0 : i32, i32
  }
  func.func @transform_4(%arg0: i32) -> (i32, i32) {
    %c0_i32 = arith.constant 0 : i32
    %c0_i32_0 = arith.constant 0 : i32
    %c0_i32_1 = arith.constant 0 : i32
    return %c0_i32, %c0_i32_0 : i32, i32
  }
  func.func @transform_5(%arg0: i32) -> (i32, i32) {
    %c0_i32 = arith.constant 0 : i32
    %c0_i32_0 = arith.constant 0 : i32
    %c0_i32_1 = arith.constant 0 : i32
    return %c0_i32, %c0_i32_0 : i32, i32
  }
  func.func @transform_6(%arg0: i32) -> (i32, i32) {
    %c0_i32 = arith.constant 0 : i32
    %c0_i32_0 = arith.constant 0 : i32
    %c0_i32_1 = arith.constant 0 : i32
    return %c0_i32, %c0_i32_0 : i32, i32
  }
  func.func @transform_7(%arg0: i32) -> (i32, i32) {
    %c0_i32 = arith.constant 0 : i32
    %c0_i32_0 = arith.constant 0 : i32
    %c0_i32_1 = arith.constant 0 : i32
    return %c0_i32, %c0_i32_0 : i32, i32
  }
  func.func @transform_8(%arg0: i32) -> (i32, i32) {
    %c0_i32 = arith.constant 0 : i32
    %c0_i32_0 = arith.constant 0 : i32
    %c0_i32_1 = arith.constant 0 : i32
    return %c0_i32, %c0_i32_0 : i32, i32
  }
  func.func @transform_9(%arg0: i32) -> (i32, i32) {
    %c0_i32 = arith.constant 0 : i32
    %c0_i32_0 = arith.constant 0 : i32
    %c0_i32_1 = arith.constant 0 : i32
    return %c0_i32, %c0_i32_0 : i32, i32
  }
  func.func @transform_10(%arg0: i32) -> (i32, i32) {
    %c0_i32 = arith.constant 0 : i32
    %c0_i32_0 = arith.constant 0 : i32
    return %arg0, %c0_i32 : i32, i32
  }
}

</mosaic_0001>

<llo_original>
// kernel: tpu_custom_call.1
$region0: #{tpu_custom_call.1}
  #allocation0 [shape = 'u32[]', space=smem, size = 0x4, offset = 0x4, fixed_abs, tag = 'smem constant byte address 0x4 - core index']
  #allocation1 [shape = 'u32[72,128]{1,0:T(1,128)}', space=vmem, size = 0x9000, scoped, tag = 'internal scratch']
  #allocation2 [shape = 'f32[1,1]{1,0:T(1,128)S(1)}', space=vmem, size = 0x200, scoped, tag = 'scoped memory for tpu_custom_call.1']
  %s0 = inlined_call_operand.hbm [shape: f32[8,8,32], index: 0, kind: input, shape index: {}]
  %s1 = inlined_call_operand.vmem [shape: s32[8,8], index: 1, kind: input, shape index: {}]
  %s2 = inlined_call_operand.vmem [shape: f32[8,32], index: 2, kind: input, shape index: {}]
  %s3 = inlined_call_operand.vmem [shape: f32[32,32], index: 3, kind: input, shape index: {}]
  %s4 = inlined_call_operand.hbm [shape: f32[32,32], index: 4, kind: input, shape index: {}]
  %s5 = inlined_call_operand.vmem [shape: f32[1,32], index: 5, kind: input, shape index: {}]
  %s6 = inlined_call_operand.vmem [shape: f32[32,16], index: 6, kind: input, shape index: {}]
  %s7 = inlined_call_operand.vmem [shape: f32[1,16], index: 7, kind: input, shape index: {}]
  %s8 = inlined_call_operand.vmem [shape: f32[1,16], index: 8, kind: input, shape index: {}]
  %s9 = inlined_call_operand.<no memory space> [shape: f32[1,1], index: 9, kind: input, shape index: {}]
  %s10 = inlined_call_operand.hbm [shape: f32[8,128], index: 10, kind: output, shape index: {}]
  %s11 = sld [smem:[#allocation0]]
  $region58: #{tpu_custom_call.1} parent=0
    _
  %s13 = ssub.s32 1, %s11
  %s14 = scalar_select 0, %s13, %s11
  %v15 = vstv %s9
  %16 = vst [vmem:[#allocation2] sm:$0x1] %v15
  $region1: #{tpu_custom_call.1} parent=0
    #allocation3 [shape = 'u8[32768]{0}', space=vmem, size = 0x8000, scoped, tag = 'input window, operand 0, single buffered']
    #allocation4 [shape = 's32[1]{0}', space=sflag, size = 0x4, scoped, tag = 'scoped memory for tpu_custom_call.1']
    #allocation5 [shape = 's32[1]{0}', space=sflag, size = 0x4, scoped, tag = 'scoped memory for tpu_custom_call.1']
    #allocation6 [shape = 'u8[16384]{0}', space=vmem, size = 0x4000, scoped, tag = 'input window, operand 4, single buffered']
    #allocation7 [shape = 's32[1]{0}', space=sflag, size = 0x4, scoped, tag = 'scoped memory for tpu_custom_call.1']
    #allocation8 [shape = 'u8[4096]{0}', space=vmem, size = 0x1000, scoped, tag = 'output window, operand 0, single buffered']
    %17 = vsyncpa [#allocation4], 0
    %18 = vsyncpa [#allocation7], 0
    %19 = vsyncpa [#allocation5], 0
    // Predicated region
    $region2: #{tpu_custom_call.1} parent=1 // pred_check
      _
    $region3: #{tpu_custom_call.1} parent=1 // pred_check_branch
      %21 = sbr.rel (0) target = $region5
    $region4: #{tpu_custom_call.1} parent=1 // pred_region
      %23 = vsyncadd [#allocation4], 0
      %s24 = sshll.u32 %s0, 4
      %s25 = int_to_ptr.hbm [resolvable:$true] %s24
      %s26 = sshll.u32 [#allocation3], 4
      %s27 = int_to_ptr.vmem [resolvable:$true] %s26
      %32 = dma.hbm_to_vmem [thread:$0]  %s25, 1024, %s27, [#allocation4], 128, 128, 8
    $region5: #{tpu_custom_call.1} parent=1 // pred_fallthru
      _
    // Predicated region
    $region6: #{tpu_custom_call.1} parent=1 // pred_check
      _
    $region7: #{tpu_custom_call.1} parent=1 // pred_check_branch
      %34 = sbr.rel (0) target = $region9
    $region8: #{tpu_custom_call.1} parent=1 // pred_region
      _
    $region9: #{tpu_custom_call.1} parent=1 // pred_fallthru
      _
    // Predicated region
    $region10: #{tpu_custom_call.1} parent=1 // pred_check
      _
    $region11: #{tpu_custom_call.1} parent=1 // pred_check_branch
      %36 = sbr.rel (0) target = $region13
    $region12: #{tpu_custom_call.1} parent=1 // pred_region
      _
    $region13: #{tpu_custom_call.1} parent=1 // pred_fallthru
      _
    // Predicated region
    $region14: #{tpu_custom_call.1} parent=1 // pred_check
      _
    $region15: #{tpu_custom_call.1} parent=1 // pred_check_branch
      %38 = sbr.rel (0) target = $region17
    $region16: #{tpu_custom_call.1} parent=1 // pred_region
      _
    $region17: #{tpu_custom_call.1} parent=1 // pred_fallthru
      _
    // Predicated region
    $region18: #{tpu_custom_call.1} parent=1 // pred_check
      _
    $region19: #{tpu_custom_call.1} parent=1 // pred_check_branch
      %40 = sbr.rel (0) target = $region21
    $region20: #{tpu_custom_call.1} parent=1 // pred_region
      %42 = vsyncadd [#allocation7], 0
      %s43 = sshll.u32 %s4, 4
      %s44 = int_to_ptr.hbm [resolvable:$true] %s43
      %s45 = sshll.u32 [#allocation6], 4
      %s46 = int_to_ptr.vmem [resolvable:$true] %s45
      %51 = dma.hbm_to_vmem [thread:$0]  %s44, 512, %s46, [#allocation7], 128, 128, 8
    $region21: #{tpu_custom_call.1} parent=1 // pred_fallthru
      _
    // Predicated region
    $region22: #{tpu_custom_call.1} parent=1 // pred_check
      _
    $region23: #{tpu_custom_call.1} parent=1 // pred_check_branch
      %53 = sbr.rel (0) target = $region25
    $region24: #{tpu_custom_call.1} parent=1 // pred_region
      _
    $region25: #{tpu_custom_call.1} parent=1 // pred_fallthru
      _
    // Predicated region
    $region26: #{tpu_custom_call.1} parent=1 // pred_check
      _
    $region27: #{tpu_custom_call.1} parent=1 // pred_check_branch
      %55 = sbr.rel (0) target = $region29
    $region28: #{tpu_custom_call.1} parent=1 // pred_region
      _
    $region29: #{tpu_custom_call.1} parent=1 // pred_fallthru
      _
    // Predicated region
    $region30: #{tpu_custom_call.1} parent=1 // pred_check
      _
    $region31: #{tpu_custom_call.1} parent=1 // pred_check_branch
      %57 = sbr.rel (0) target = $region33
    $region32: #{tpu_custom_call.1} parent=1 // pred_region
      _
    $region33: #{tpu_custom_call.1} parent=1 // pred_fallthru
      _
    // Predicated region
    $region34: #{tpu_custom_call.1} parent=1 // pred_check
      _
    $region35: #{tpu_custom_call.1} parent=1 // pred_check_branch
      %59 = sbr.rel (0) target = $region37
    $region36: #{tpu_custom_call.1} parent=1 // pred_region
      _
    $region37: #{tpu_custom_call.1} parent=1 // pred_fallthru
      _
    // Predicated region
    $region38: #{tpu_custom_call.1} parent=1 // pred_check
      _
    $region39: #{tpu_custom_call.1} parent=1 // pred_check_branch
      %61 = sbr.rel (0) target = $region41
    $region40: #{tpu_custom_call.1} parent=1 // pred_region
      _
    $region41: #{tpu_custom_call.1} parent=1 // pred_fallthru
      _
    // Predicated region
    $region42: #{tpu_custom_call.1} parent=1 // pred_check
      _
    $region43: #{tpu_custom_call.1} parent=1 // pred_check_branch
      %63 = sbr.rel (0) target = $region45
    $region44: #{tpu_custom_call.1} parent=1 // pred_region
      %65 = dma.done [#allocation4], 1024
    $region45: #{tpu_custom_call.1} parent=1 // pred_fallthru
      _
    // Predicated region
    $region46: #{tpu_custom_call.1} parent=1 // pred_check
      _
    $region47: #{tpu_custom_call.1} parent=1 // pred_check_branch
      %67 = sbr.rel (0) target = $region49
    $region48: #{tpu_custom_call.1} parent=1 // pred_region
      %69 = dma.done [#allocation7], 512
    $region49: #{tpu_custom_call.1} parent=1 // pred_fallthru
      _
    %v70 = vld [vmem:[#allocation3] sm:$0xff]
    %v71 = vld [vmem:[#allocation3 + $0x8] sm:$0xff]
    %v72 = vld [vmem:[#allocation3 + $0x10] sm:$0xff]
    %v73 = vld [vmem:[#allocation3 + $0x18] sm:$0xff]
    %v74 = vld [vmem:[#allocation3 + $0x20] sm:$0xff]
    %v75 = vld [vmem:[#allocation3 + $0x28] sm:$0xff]
    %v76 = vld [vmem:[#allocation3 + $0x30] sm:$0xff]
    %v77 = vld [vmem:[#allocation3 + $0x38] sm:$0xff]
    %v78 = vld [vmem:[%s1] sm:$0xff]
    %v79 = vcvt.s32.f32 %v78
    %v80 = vperm.slane %v79, 0
    %v81 = vlaneseq
    %v82 = vshrl.u32 %v81, 7
    %84 = vset.pattern.permute.xlu0 %v82
    %85 = vperm.xlu0 %84, %v80
    %v86 = vpop.permute.xlu0 %85
    %v87 = vperm.slane %v79, 1
    %v88 = vlaneseq
    %v89 = vshrl.u32 %v88, 7
    %91 = vset.pattern.permute.xlu0 %v89
    %92 = vperm.xlu0 %91, %v87
    %v93 = vpop.permute.xlu0 %92
    %v94 = vperm.slane %v79, 2
    %v95 = vlaneseq
    %v96 = vshrl.u32 %v95, 7
    %98 = vset.pattern.permute.xlu0 %v96
    %99 = vperm.xlu0 %98, %v94
    %v100 = vpop.permute.xlu0 %99
    %v101 = vperm.slane %v79, 3
    %v102 = vlaneseq
    %v103 = vshrl.u32 %v102, 7
    %105 = vset.pattern.permute.xlu0 %v103
    %106 = vperm.xlu0 %105, %v101
    %v107 = vpop.permute.xlu0 %106
    %v108 = vperm.slane %v79, 4
    %v109 = vlaneseq
    %v110 = vshrl.u32 %v109, 7
    %112 = vset.pattern.permute.xlu0 %v110
    %113 = vperm.xlu0 %112, %v108
    %v114 = vpop.permute.xlu0 %113
    %v115 = vperm.slane %v79, 5
    %v116 = vlaneseq
    %v117 = vshrl.u32 %v116, 7
    %119 = vset.pattern.permute.xlu0 %v117
    %120 = vperm.xlu0 %119, %v115
    %v121 = vpop.permute.xlu0 %120
    %v122 = vperm.slane %v79, 6
    %v123 = vlaneseq
    %v124 = vshrl.u32 %v123, 7
    %126 = vset.pattern.permute.xlu0 %v124
    %127 = vperm.xlu0 %126, %v122
    %v128 = vpop.permute.xlu0 %127
    %v129 = vperm.slane %v79, 7
    %v130 = vlaneseq
    %v131 = vshrl.u32 %v130, 7
    %133 = vset.pattern.permute.xlu0 %v131
    %134 = vperm.xlu0 %133, %v129
    %v135 = vpop.permute.xlu0 %134
    %v136 = vmul.f32 %v70, %v86
    %v137 = vmul.f32 %v71, %v93
    %v138 = vmul.f32 %v72, %v100
    %v139 = vmul.f32 %v73, %v107
    %v140 = vmul.f32 %v74, %v114
    %v141 = vmul.f32 %v75, %v121
    %v142 = vmul.f32 %v76, %v128
    %v143 = vmul.f32 %v77, %v135
    %vm144 = vcmask 261120
    %v145 = vsel %vm144, %v136, 0.0
    %v146 = vrot.slane %v145, 4
    %v147 = vadd.f32 %v145, %v146
    %v148 = vrot.slane %v147, 2
    %v149 = vadd.f32 %v147, %v148
    %v150 = vrot.slane %v149, 1
    %v151 = vadd.f32 %v149, %v150
    %v152 = vsel %vm144, %v137, 0.0
    %v153 = vrot.slane %v152, 4
    %v154 = vadd.f32 %v152, %v153
    %v155 = vrot.slane %v154, 2
    %v156 = vadd.f32 %v154, %v155
    %v157 = vrot.slane %v156, 1
    %v158 = vadd.f32 %v156, %v157
    %v159 = vsel %vm144, %v138, 0.0
    %v160 = vrot.slane %v159, 4
    %v161 = vadd.f32 %v159, %v160
    %v162 = vrot.slane %v161, 2
    %v163 = vadd.f32 %v161, %v162
    %v164 = vrot.slane %v163, 1
    %v165 = vadd.f32 %v163, %v164
    %v166 = vsel %vm144, %v139, 0.0
    %v167 = vrot.slane %v166, 4
    %v168 = vadd.f32 %v166, %v167
    %v169 = vrot.slane %v168, 2
    %v170 = vadd.f32 %v168, %v169
    %v171 = vrot.slane %v170, 1
    %v172 = vadd.f32 %v170, %v171
    %v173 = vsel %vm144, %v140, 0.0
    %v174 = vrot.slane %v173, 4
    %v175 = vadd.f32 %v173, %v174
    %v176 = vrot.slane %v175, 2
    %v177 = vadd.f32 %v175, %v176
    %v178 = vrot.slane %v177, 1
    %v179 = vadd.f32 %v177, %v178
    %v180 = vsel %vm144, %v141, 0.0
    %v181 = vrot.slane %v180, 4
    %v182 = vadd.f32 %v180, %v181
    %v183 = vrot.slane %v182, 2
    %v184 = vadd.f32 %v182, %v183
    %v185 = vrot.slane %v184, 1
    %v186 = vadd.f32 %v184, %v185
    %v187 = vsel %vm144, %v142, 0.0
    %v188 = vrot.slane %v187, 4
    %v189 = vadd.f32 %v187, %v188
    %v190 = vrot.slane %v189, 2
    %v191 = vadd.f32 %v189, %v190
    %v192 = vrot.slane %v191, 1
    %v193 = vadd.f32 %v191, %v192
    %v194 = vsel %vm144, %v143, 0.0
    %v195 = vrot.slane %v194, 4
    %v196 = vadd.f32 %v194, %v195
    %v197 = vrot.slane %v196, 2
    %v198 = vadd.f32 %v196, %v197
    %v199 = vrot.slane %v198, 1
    %v200 = vadd.f32 %v198, %v199
    %vm201 = vcmask 64512
    %v202 = vsel %vm201, %v79, 0.0
    %203 = vadd.xlane.f32.xlu0 %v202
    %v204 = vpop.xlane.xlu0 %203
    %v205 = vmax.f32 %v204, 0.0001
    %v207 = vrot.slane %v205, 1
    %v208 = vrot.slane %v205, 2
    %v209 = vrot.slane %v205, 3
    %v210 = vrot.slane %v205, 4
    %v211 = vrot.slane %v205, 5
    %v212 = vrot.slane %v205, 6
    %v213 = vrot.slane %v205, 7
    %v222 = vrcp.pop %v205
    %v223 = vmul.f32 %v205, %v222
    %v224 = vsub.f32 1.0, %v223
    %v225 = vmul.f32 %v222, %v224
    %v226 = vadd.f32 %v222, %v225
    %vm227 = vweird.f32 %v205
    %vm228 = vweird.f32 %v222
    %vm229 = vmor %vm227, %vm228
    %v230 = vsel %vm229, %v222, %v226
    %v231 = vand.u32 2147483647, %v205
    %vm232 = vcmp.eq.f32.partialorder %v231, 8.507059e+37
    %v233 = vand.u32 %v205, 2147483648
    %v234 = vor.u32 1.1754944e-38, %v233
    %v235 = vsel %vm232, %v234, %v230
    %v236 = vmul.f32 %v151, %v235
    %v237 = vrcp.pop %v207
    %v238 = vmul.f32 %v207, %v237
    %v239 = vsub.f32 1.0, %v238
    %v240 = vmul.f32 %v237, %v239
    %v241 = vadd.f32 %v237, %v240
    %vm242 = vweird.f32 %v207
    %vm243 = vweird.f32 %v237
    %vm244 = vmor %vm242, %vm243
    %v245 = vsel %vm244, %v237, %v241
    %v246 = vand.u32 2147483647, %v207
    %vm247 = vcmp.eq.f32.partialorder %v246, 8.507059e+37
    %v248 = vand.u32 %v207, 2147483648
    %v249 = vor.u32 1.1754944e-38, %v248
    %v250 = vsel %vm247, %v249, %v245
    %v251 = vmul.f32 %v158, %v250
    %v252 = vrcp.pop %v208
    %v253 = vmul.f32 %v208, %v252
    %v254 = vsub.f32 1.0, %v253
    %v255 = vmul.f32 %v252, %v254
    %v256 = vadd.f32 %v252, %v255
    %vm257 = vweird.f32 %v208
    %vm258 = vweird.f32 %v252
    %vm259 = vmor %vm257, %vm258
    %v260 = vsel %vm259, %v252, %v256
    %v261 = vand.u32 2147483647, %v208
    %vm262 = vcmp.eq.f32.partialorder %v261, 8.507059e+37
    %v263 = vand.u32 %v208, 2147483648
    %v264 = vor.u32 1.1754944e-38, %v263
    %v265 = vsel %vm262, %v264, %v260
    %v266 = vmul.f32 %v165, %v265
    %v267 = vrcp.pop %v209
    %v268 = vmul.f32 %v209, %v267
    %v269 = vsub.f32 1.0, %v268
    %v270 = vmul.f32 %v267, %v269
    %v271 = vadd.f32 %v267, %v270
    %vm272 = vweird.f32 %v209
    %vm273 = vweird.f32 %v267
    %vm274 = vmor %vm272, %vm273
    %v275 = vsel %vm274, %v267, %v271
    %v276 = vand.u32 2147483647, %v209
    %vm277 = vcmp.eq.f32.partialorder %v276, 8.507059e+37
    %v278 = vand.u32 %v209, 2147483648
    %v279 = vor.u32 1.1754944e-38, %v278
    %v280 = vsel %vm277, %v279, %v275
    %v281 = vmul.f32 %v172, %v280
    %v282 = vrcp.pop %v210
    %v283 = vmul.f32 %v210, %v282
    %v284 = vsub.f32 1.0, %v283
    %v285 = vmul.f32 %v282, %v284
    %v286 = vadd.f32 %v282, %v285
    %vm287 = vweird.f32 %v210
    %vm288 = vweird.f32 %v282
    %vm289 = vmor %vm287, %vm288
    %v290 = vsel %vm289, %v282, %v286
    %v291 = vand.u32 2147483647, %v210
    %vm292 = vcmp.eq.f32.partialorder %v291, 8.507059e+37
    %v293 = vand.u32 %v210, 2147483648
    %v294 = vor.u32 1.1754944e-38, %v293
    %v295 = vsel %vm292, %v294, %v290
    %v296 = vmul.f32 %v179, %v295
    %v297 = vrcp.pop %v211
    %v298 = vmul.f32 %v211, %v297
    %v299 = vsub.f32 1.0, %v298
    %v300 = vmul.f32 %v297, %v299
    %v301 = vadd.f32 %v297, %v300
    %vm302 = vweird.f32 %v211
    %vm303 = vweird.f32 %v297
    %vm304 = vmor %vm302, %vm303
    %v305 = vsel %vm304, %v297, %v301
    %v306 = vand.u32 2147483647, %v211
    %vm307 = vcmp.eq.f32.partialorder %v306, 8.507059e+37
    %v308 = vand.u32 %v211, 2147483648
    %v309 = vor.u32 1.1754944e-38, %v308
    %v310 = vsel %vm307, %v309, %v305
    %v311 = vmul.f32 %v186, %v310
    %v312 = vrcp.pop %v212
    %v313 = vmul.f32 %v212, %v312
    %v314 = vsub.f32 1.0, %v313
    %v315 = vmul.f32 %v312, %v314
    %v316 = vadd.f32 %v312, %v315
    %vm317 = vweird.f32 %v212
    %vm318 = vweird.f32 %v312
    %vm319 = vmor %vm317, %vm318
    %v320 = vsel %vm319, %v312, %v316
    %v321 = vand.u32 2147483647, %v212
    %vm322 = vcmp.eq.f32.partialorder %v321, 8.507059e+37
    %v323 = vand.u32 %v212, 2147483648
    %v324 = vor.u32 1.1754944e-38, %v323
    %v325 = vsel %vm322, %v324, %v320
    %v326 = vmul.f32 %v193, %v325
    %v327 = vrcp.pop %v213
    %v328 = vmul.f32 %v213, %v327
    %v329 = vsub.f32 1.0, %v328
    %v330 = vmul.f32 %v327, %v329
    %v331 = vadd.f32 %v327, %v330
    %vm332 = vweird.f32 %v213
    %vm333 = vweird.f32 %v327
    %vm334 = vmor %vm332, %vm333
    %v335 = vsel %vm334, %v327, %v331
    %v336 = vand.u32 2147483647, %v213
    %vm337 = vcmp.eq.f32.partialorder %v336, 8.507059e+37
    %v338 = vand.u32 %v213, 2147483648
    %v339 = vor.u32 1.1754944e-38, %v338
    %v340 = vsel %vm337, %v339, %v335
    %v341 = vmul.f32 %v200, %v340
    %v342 = vld [vmem:[%s2] sm:$0xff]
    %v343 = vld [vmem:[%s3] sm:$0xff]
    %v344 = vld [vmem:[%s3 + $0x8] sm:$0xff]
    %v345 = vld [vmem:[%s3 + $0x10] sm:$0xff]
    %v346 = vld [vmem:[%s3 + $0x18] sm:$0xff]
    %v347 = vld [vmem:[#allocation6] sm:$0xff]
    %v348 = vld [vmem:[#allocation6 + $0x8] sm:$0xff]
    %v349 = vld [vmem:[#allocation6 + $0x10] sm:$0xff]
    %v350 = vld [vmem:[#allocation6 + $0x18] sm:$0xff]
    %v352 = vsel %vm144, %v342, 0
    %354 = vmatpush.msra.mxu0 0.0
    %355 = vmatpush.msra.mxu0 0.0
    %356 = vmatpush.msra.mxu0 0.0
    %357 = vmatpush.msra.mxu0 0.0
    %358 = vmatpush.msra.mxu0 0.0
    %359 = vmatpush.msra.mxu0 0.0
    %360 = vmatpush.msra.mxu0 0.0
    %361 = vmatpush.msra.mxu0 0.0
    %362 = vmatpush.msra.mxu0 0.0
    %363 = vmatpush.msra.mxu0 0.0
    %364 = vmatpush.msra.mxu0 0.0
    %365 = vmatpush.msra.mxu0 0.0
    %366 = vmatpush.msra.mxu0 %v350
    %367 = vmatpush.msra.mxu0 %v349
    %368 = vmatpush.msra.mxu0 %v348
    %369 = vmatpush.msra.mxu0 %v347
    %370 = vmatmul.f32.gmra.mxu0 %v352
    %v371 = vpop.f32.mrf.mxu0
    %v372 = vadd.f32 0.0, %v371
    %373 = vdwg.mxu0
    %v382 = vrot.slane %v251, 7
    %vm383 = vcmask 1041409
    %v384 = vsel %vm383, %v382, %v236
    %v385 = vrot.slane %v266, 6
    %vm386 = vcmask 1042434
    %v387 = vsel %vm386, %v385, %v384
    %v388 = vrot.slane %v281, 5
    %vm389 = vcmask 1043459
    %v390 = vsel %vm389, %v388, %v387
    %v391 = vrot.slane %v296, 4
    %vm392 = vcmask 1044484
    %v393 = vsel %vm392, %v391, %v390
    %v394 = vrot.slane %v311, 3
    %vm395 = vcmask 1045509
    %v396 = vsel %vm395, %v394, %v393
    %v397 = vrot.slane %v326, 2
    %vm398 = vcmask 1046534
    %v399 = vsel %vm398, %v397, %v396
    %v400 = vrot.slane %v341, 1
    %vm401 = vcmask 1047559
    %v402 = vsel %vm401, %v400, %v399
    %v403 = vsel %vm144, %v402, 0
    %405 = vmatpush.msra.mxu0 0.0
    %406 = vmatpush.msra.mxu0 0.0
    %407 = vmatpush.msra.mxu0 0.0
    %408 = vmatpush.msra.mxu0 0.0
    %409 = vmatpush.msra.mxu0 0.0
    %410 = vmatpush.msra.mxu0 0.0
    %411 = vmatpush.msra.mxu0 0.0
    %412 = vmatpush.msra.mxu0 0.0
    %413 = vmatpush.msra.mxu0 0.0
    %414 = vmatpush.msra.mxu0 0.0
    %415 = vmatpush.msra.mxu0 0.0
    %416 = vmatpush.msra.mxu0 0.0
    %417 = vmatpush.msra.mxu0 %v346
    %418 = vmatpush.msra.mxu0 %v345
    %419 = vmatpush.msra.mxu0 %v344
    %420 = vmatpush.msra.mxu0 %v343
    %421 = vmatmul.f32.gmra.mxu0 %v403
    %v422 = vpop.f32.mrf.mxu0
    %v423 = vadd.f32 %v372, %v422
    %424 = vdwg.mxu0
    %v425 = vld [vmem:[%s5] sm:$0x1]
    %v427 = vperm.slane %v425, 0
    %v429 = vadd.f32 %v423, %v427
    %v430 = vmul.f32 %v429, 0.5
    %v431 = vmul.f32 %v429, 0.044715
    %v432 = vmul.f32 %v431, %v429
    %v433 = vmul.f32 %v432, %v429
    %v434 = vadd.f32 %v429, %v433
    %v435 = vmul.f32 %v434, 0.7978846
    %v436 = vtanh.pop %v435
    %v437 = vadd.f32 %v436, 1.0
    %v438 = vmul.f32 %v430, %v437
    %v439 = vld [vmem:[%s6] sm:$0xff]
    %v440 = vld [vmem:[%s6 + $0x8] sm:$0xff]
    %v441 = vld [vmem:[%s6 + $0x10] sm:$0xff]
    %v442 = vld [vmem:[%s6 + $0x18] sm:$0xff]
    %v443 = vld [vmem:[%s7] sm:$0x1]
    %v445 = vperm.slane %v443, 0
    %v448 = vsel %vm144, %v438, 0
    %450 = vmatpush.msra.mxu0 0.0
    %451 = vmatpush.msra.mxu0 0.0
    %452 = vmatpush.msra.mxu0 0.0
    %453 = vmatpush.msra.mxu0 0.0
    %454 = vmatpush.msra.mxu0 0.0
    %455 = vmatpush.msra.mxu0 0.0
    %456 = vmatpush.msra.mxu0 0.0
    %457 = vmatpush.msra.mxu0 0.0
    %458 = vmatpush.msra.mxu0 0.0
    %459 = vmatpush.msra.mxu0 0.0
    %460 = vmatpush.msra.mxu0 0.0
    %461 = vmatpush.msra.mxu0 0.0
    %462 = vmatpush.msra.mxu0 %v442
    %463 = vmatpush.msra.mxu0 %v441
    %464 = vmatpush.msra.mxu0 %v440
    %465 = vmatpush.msra.mxu0 %v439
    %466 = vmatmul.f32.gmra.mxu0 %v448
    %v467 = vpop.f32.mrf.mxu0
    %v468 = vadd.f32 %v445, %v467
    %469 = vdwg.mxu0
    %v470 = vmul.f32 %v468, 0.5
    %v471 = vmul.f32 %v468, 0.044715
    %v472 = vmul.f32 %v471, %v468
    %v473 = vmul.f32 %v472, %v468
    %v474 = vadd.f32 %v468, %v473
    %v475 = vmul.f32 %v474, 0.7978846
    %v476 = vtanh.pop %v475
    %v477 = vadd.f32 %v476, 1.0
    %v478 = vmul.f32 %v470, %v477
    %v479 = vld [vmem:[%s8] sm:$0x1]
    %v481 = vperm.slane %v479, 0
    %v483 = vmul.f32 %v478, %v481
    %vm484 = vcmask 130048
    %v485 = vsel %vm484, %v483, 0.0
    %486 = vadd.xlane.f32.xlu0 %v485
    %v487 = vpop.xlane.xlu0 %486
    %v488 = vld [vmem:[#allocation2] sm:$0x1]
    %v490 = vperm.slane %v488, 0
    %v492 = vadd.f32 %v487, %v490
    %v493 = vxor.u32 %v492, 2147483648
    %v494 = vmul.f32 %v493, 1.442695
    %v495 = vpow.pop %v494
    %v496 = vadd.f32 %v495, 1.0
    %v497 = vrcp.pop %v496
    %v498 = vmul.f32 %v496, %v497
    %v499 = vsub.f32 1.0, %v498
    %v500 = vmul.f32 %v497, %v499
    %v501 = vadd.f32 %v497, %v500
    %vm502 = vweird.f32 %v496
    %vm503 = vweird.f32 %v497
    %vm504 = vmor %vm502, %vm503
    %v505 = vsel %vm504, %v497, %v501
    %v506 = vand.u32 2147483647, %v496
    %vm507 = vcmp.eq.f32.partialorder %v506, 8.507059e+37
    %v508 = vand.u32 %v496, 2147483648
    %v509 = vor.u32 1.1754944e-38, %v508
    %v510 = vsel %vm507, %v509, %v505
    %v511 = vmul.f32 1.0, %v510
    %v512 = vlaneseq
    %v513 = vand.u32 %v512, 127
    %vm514 = vcmp.eq.s32.totalorder %v513, 0
    %vm515 = vcmp.eq.s32.totalorder %v513, 1
    %517 = vset.pattern.permute.xlu0 0
    %518 = vperm.xlu0 %517, %v511
    %v519 = vpop.permute.xlu0 %518
    %v521 = vsel %vm515, %v519, 0.0
    %523 = vset.pattern.permute.xlu0 0
    %524 = vperm.xlu0 %523, %v492
    %v525 = vpop.permute.xlu0 %524
    %v527 = vsel %vm514, %v525, %v521
    %528 = vst [vmem:[#allocation8] sm:$0xff] %v527
    // Predicated region
    $region50: #{tpu_custom_call.1} parent=1 // pred_check
      _
    $region51: #{tpu_custom_call.1} parent=1 // pred_check_branch
      %530 = sbr.rel (0) target = $region53
    $region52: #{tpu_custom_call.1} parent=1 // pred_region
      %532 = vsyncadd [#allocation5], 0
      %s534 = sshll.u32 [#allocation8], 4
      %s535 = int_to_ptr.vmem [resolvable:$true] %s534
      %s536 = sshll.u32 %s10, 4
      %s537 = int_to_ptr.hbm [resolvable:$true] %s536
      %539 = dma.vmem_to_hbm [thread:$0]  %s535, 128, %s537, [#allocation5]
    $region53: #{tpu_custom_call.1} parent=1 // pred_fallthru
      _
    // Predicated region
    $region54: #{tpu_custom_call.1} parent=1 // pred_check
      _
    $region55: #{tpu_custom_call.1} parent=1 // pred_check_branch
      %541 = sbr.rel (0) target = $region57
    $region56: #{tpu_custom_call.1} parent=1 // pred_region
      %543 = dma.done [#allocation5], 128
    $region57: #{tpu_custom_call.1} parent=1 // pred_fallthru
      _
    %544 = vsyncpa [#allocation4], 1
    %545 = vsyncpa [#allocation7], 1
    %546 = vsyncpa [#allocation5], 1

</llo_original>
